<compile_context>
chip_gen: v5e
topology: v5e:2x2
jax: 0.10.0
libtpu: 0.0.40
codegen_flags: <defaults>
</compile_context>

<pallas_src>
import functools

import jax
import jax.numpy as jnp
from jax import lax
from jax.experimental import pallas as pl
from jax.experimental.pallas import tpu as pltpu


# ---------------------------------------------------------------------------
# Fractional-differencing filter weights (exact port of get_ws / get_wd,
# vectorized over the input dimension).  Tiny parameter-setup glue in pure JAX.
# ---------------------------------------------------------------------------
def get_wd(d, K):
    # d: (1, I)  ->  returns (K, I); row 0 is lag K, row K-1 is lag 1.
    dv = d[0]                                   # (I,)
    w = [None] * (K + 1)
    w[K] = jnp.ones_like(dv)
    for i in range(K):
        w[K - i - 1] = w[K - i] * (i - dv) / (i + 1)
    return jnp.stack(w[0:K], axis=0)            # (K, I)


def _round_up(x, m):
    return ((x + m - 1) // m) * m


# ---------------------------------------------------------------------------
# Pallas kernel: the serial recurrence only.
#   pre_ref : (Tc*Bb, H)  pre-activations for this (batch block, time chunk),
#             time flattened into the sublane axis (row = step*Bb + batch)
#   whh_ref : (H, H) = W_hh.T (pre-transposed, f32, resident)
#   h_out   : (Bb, H)       final hidden state for this batch block
#   h_scr   : (Bb, H) f32   VMEM-resident hidden state across time chunks
# Grid = (batch_blocks [parallel], time_chunks [arbitrary]).
# ---------------------------------------------------------------------------
def mrnn_recurrence_kernel(pre_ref, whh_ref, h_out_ref, h_scr, *, Tc, Bb, unroll):
    t_blk = pl.program_id(1)

    @pl.when(t_blk == 0)
    def _init():
        h_scr[...] = jnp.zeros_like(h_scr)

    # Keep W_hh.T live in vregs only when it comfortably fits the vreg file;
    # otherwise let every dot read it straight from VMEM (avoids spilling it
    # across the unrolled serial loop for large H).
    H = whh_ref.shape[0]
    keep_live = (H * H * jnp.dtype(whh_ref.dtype).itemsize) <= 64 * 1024
    whh_live = whh_ref[...] if keep_live else None

    def body(i, h):
        row0 = pl.multiple_of(i * Bb, Bb)                     # sublane-aligned slice
        pre = pre_ref[pl.ds(row0, Bb), :].astype(jnp.float32)
        whh = whh_live if keep_live else whh_ref[...]
        return jnp.tanh(pre + jnp.dot(h, whh, preferred_element_type=jnp.float32))

    # No tail mask needed: padded (leading) steps have pre == 0, which keeps h at 0.
    h = lax.fori_loop(0, Tc, body, h_scr[...], unroll=unroll)
    h_scr[...] = h

    @pl.when(t_blk == pl.num_programs(1) - 1)
    def _finalize():
        h_out_ref[...] = h


# ---------------------------------------------------------------------------
# Wrapper: batched precompute (XLA) + chunked Pallas recurrence + tiny readout.
# ---------------------------------------------------------------------------
def mrnn_fixd_forward(inputs, params, K, *, tc=256, batch_block=8,
                      pre_dtype=jnp.float32, unroll=8,
                      pre_vmem_budget_bytes=8 * 1024 * 1024):
    """inputs: (T, B, I) float32.  Returns (y_last, h_last) like the torch module."""
    T, B, I = inputs.shape
    H = params["weight_hh"].shape[0]

    d = 0.5 * jax.nn.sigmoid(params["bd"])       # (1, I)
    wd = get_wd(d, K)                            # (K, I)

    # ---- all h-independent work batched over time, outside the kernel ----
    # m_t = sum_{k=1..K} wd_{lag k} * x_{t-k}, with zero history before t=0.
    xpad = jnp.concatenate(
        [jnp.zeros((K, B, I), inputs.dtype), inputs], axis=0)          # (T+K, B, I)
    mem = sum(wd[k][None, None, :] * xpad[k:k + T] for k in range(K))  # (T, B, I)

    pre = (inputs.reshape(T * B, I) @ params["weight_ih"].T
           + mem.reshape(T * B, I) @ params["weight_mh"].T
           + params["bias_h"]).reshape(T, B, H)                        # (T, B, H)

    # ---- layout: pad batch to a sublane multiple, flatten time into sublanes ----
    itemsize = jnp.dtype(pre_dtype).itemsize
    sub = 8 if itemsize == 4 else 16                 # f32: (8,128) tiles; bf16: (16,128)
    Bb = _round_up(max(batch_block, sub), sub)       # batch block (per grid step / core)
    Bp = _round_up(max(B, Bb), Bb)
    nb_b = Bp // Bb

    pre = pre.astype(pre_dtype)
    if Bp != B:
        pre = jnp.concatenate([pre, jnp.zeros((T, Bp - B, H), pre.dtype)], axis=1)

    # Time chunk: as large as the VMEM budget for the double-buffered pre stream allows
    # (keeps us inside v5e's 16 MiB scoped default and v7x's smaller VMEM without
    # touching vmem_limit_bytes).
    tc_cap = max(1, pre_vmem_budget_bytes // (2 * Bb * H * itemsize))
    Tc = max(1, min(tc, T, tc_cap))
    num_t = pl.cdiv(T, Tc)
    T_pad = num_t * Tc
    if T_pad != T:
        # FRONT-pad with zeros: tanh(0 + 0 @ Whh) = 0 keeps h at its zero init,
        # so the kernel needs no per-step mask and the last step is the true t = T-1.
        pre = jnp.concatenate(
            [jnp.zeros((T_pad - T, Bp, H), pre.dtype), pre], axis=0)

    # (T_pad, Bp, H) -> (nb_b, T_pad*Bb, H): sublane-dense blocks, row = t*Bb + batch.
    pre = pre.reshape(T_pad, nb_b, Bb, H).transpose(1, 0, 2, 3).reshape(
        nb_b, T_pad * Bb, H)

    whh_t = params["weight_hh"].T.astype(jnp.float32)   # (H, H), resident, no O(T) traffic

    kernel = functools.partial(mrnn_recurrence_kernel, Tc=Tc, Bb=Bb,
                               unroll=max(1, min(unroll, Tc)))

    h_pad = pl.pallas_call(
        kernel,
        out_shape=jax.ShapeDtypeStruct((nb_b, Bb, H), jnp.float32),
        grid=(nb_b, num_t),
        in_specs=[
            pl.BlockSpec((None, Tc * Bb, H), lambda b, g: (b, g, 0)),   # pre chunk
            pl.BlockSpec((H, H), lambda b, g: (0, 0)),                  # W_hh.T (resident)
        ],
        out_specs=pl.BlockSpec((None, Bb, H), lambda b, g: (b, 0, 0)),
        scratch_shapes=[pltpu.VMEM((Bb, H), jnp.float32)],              # hidden state
        compiler_params=pltpu.CompilerParams(
            # batch blocks are independent (v7x megacore splits them); time is serial.
            dimension_semantics=("parallel", "arbitrary")),
    )(pre, whh_t)

    h_last = h_pad.reshape(Bp, H)[:B]
    # Tiny readout done once outside the kernel (keeps the O<128 lane-sparse store out).
    y = h_last @ params["weight_ho"].T + params["bias_o"]
    return y, h_last


# ---------------------------------------------------------------------------
# Pure-JAX reference (original step-by-step formulation) for correctness check.
# ---------------------------------------------------------------------------
def mrnn_fixd_reference(inputs, params, K):
    d = 0.5 * jax.nn.sigmoid(params["bd"])
    wd = get_wd(d, K)
    T, B, I = inputs.shape
    H = params["weight_hh"].shape[0]
    h = jnp.zeros((B, H), jnp.float32)
    hist = jnp.zeros((K, B, I), jnp.float32)
    y = None
    for t in range(T):
        x = inputs[t]
        mem = jnp.sum(wd[:, None, :] * hist, axis=0)
        h = jnp.tanh(x @ params["weight_ih"].T + h @ params["weight_hh"].T
                     + mem @ params["weight_mh"].T + params["bias_h"])
        y = h @ params["weight_ho"].T + params["bias_o"]
        hist = jnp.concatenate([hist[1:], x[None]], axis=0)
    return y, h


if __name__ == "__main__":
    # Small shapes consistent with the module's forward.
    T, B, I, H, O, K = 10, 2, 8, 32, 4, 4

    key = jax.random.PRNGKey(0)
    k_x, k_ih, k_hh, k_mh, k_ho = jax.random.split(key, 5)

    params = {
        # bd is initialized to zeros in the torch module
        "bd": jnp.zeros((1, I), jnp.float32),
        "weight_ih": jax.random.normal(k_ih, (H, I), jnp.float32) / jnp.sqrt(I),
        "weight_hh": jax.random.normal(k_hh, (H, H), jnp.float32) / jnp.sqrt(H),
        "weight_mh": jax.random.normal(k_mh, (H, I), jnp.float32) / jnp.sqrt(I),
        "bias_h": jnp.zeros((1, H), jnp.float32),
        "weight_ho": jax.random.normal(k_ho, (O, H), jnp.float32) / jnp.sqrt(H),
        "bias_o": jnp.zeros((1, O), jnp.float32),
    }

    inputs = jax.random.normal(k_x, (T, B, I), jnp.float32)

    y_ref, h_ref = mrnn_fixd_reference(inputs, params, K)

    # f32 pre stream with a small time chunk: exercises chunking + front padding.
    y, h = mrnn_fixd_forward(inputs, params, K, tc=4, pre_dtype=jnp.float32)
    y = jax.block_until_ready(y)
    h = jax.block_until_ready(h)
    assert jnp.allclose(y, y_ref, atol=2e-3, rtol=2e-3), "f32 y mismatch"
    assert jnp.allclose(h, h_ref, atol=2e-3, rtol=2e-3), "f32 h mismatch"

    # bf16 pre stream (production default for v6e/v7x), single time chunk.
    y16, h16 = mrnn_fixd_forward(inputs, params, K, tc=256, pre_dtype=jnp.bfloat16)
    y16 = jax.block_until_ready(y16)
    h16 = jax.block_until_ready(h16)
    assert jnp.allclose(y16, y_ref, atol=5e-2, rtol=5e-2), "bf16 y mismatch"
    assert jnp.allclose(h16, h_ref, atol=5e-2, rtol=5e-2), "bf16 h mismatch"

    print("KERNEL_OK")
</pallas_src>

<mosaic_0001>
module attributes {stable_mosaic.version = 11 : i64} {
  func.func @mrnn_recurrence_kernel(%arg0: i32, %arg1: i32, %arg2: memref<1x32x32xf32, #tpu.memory_space<vmem>>, %arg3: memref<32x32xf32, #tpu.memory_space<vmem>>, %arg4: memref<1x8x32xf32, #tpu.memory_space<vmem>>, %arg5: memref<8x32xf32, #tpu.memory_space<vmem>>) attributes {dimension_semantics = [#tpu.dimension_semantics<parallel>, #tpu.dimension_semantics<arbitrary>], iteration_bounds = array<i64: 1, 3>, scalar_prefetch = 0 : i64, scratch_operands = 1 : i64, tpu.core_type = #tpu.core_type<tc>, window_params = [{transform_indices = @transform_0, window_bounds = array<i64: 1, 32, 32>}, {pipeline_mode = #tpu.pipeline_mode<synchronous>, transform_indices = @transform_1, window_bounds = array<i64: 32, 32>}, {transform_indices = @transform_2, window_bounds = array<i64: 1, 8, 32>}]} {
    %c0_i32 = arith.constant 0 : i32
    %0 = arith.cmpi eq, %arg1, %c0_i32 : i32
    %1 = arith.extui %0 : i1 to i32
    %c0_i32_0 = arith.constant 0 : i32
    %2 = arith.cmpi ne, %1, %c0_i32_0 : i32
    scf.if %2 {
      %cst_23 = arith.constant 0.000000e+00 : f32
      %41 = vector.broadcast %cst_23 : f32 to vector<8x32xf32>
      %c0_24 = arith.constant 0 : index
      %c0_25 = arith.constant 0 : index
      %42 = vector.load %arg5[%c0_24, %c0_25] : memref<8x32xf32, #tpu.memory_space<vmem>>, vector<8x32xf32>
      tpu.vector_store %arg5[%c0_24, %c0_25], %41 {strides = array<i32>} : memref<8x32xf32, #tpu.memory_space<vmem>>, vector<8x32xf32>,
    } else {
    }
    %c0 = arith.constant 0 : index
    %c0_1 = arith.constant 0 : index
    %3 = vector.load %arg3[%c0, %c0_1] : memref<32x32xf32, #tpu.memory_space<vmem>>, vector<32x32xf32>
    %c0_2 = arith.constant 0 : index
    %c0_3 = arith.constant 0 : index
    %4 = vector.load %arg5[%c0_2, %c0_3] : memref<8x32xf32, #tpu.memory_space<vmem>>, vector<8x32xf32>
    %c0_i32_4 = arith.constant 0 : i32
    %c8_i32 = arith.constant 8 : i32
    %5 = arith.muli %c0_i32_4, %c8_i32 : i32
    %6 = tpu.assume_multiple %5, 8 : i32
    %c0_5 = arith.constant 0 : index
    %7 = arith.index_cast %6 : i32 to index
    %c0_6 = arith.constant 0 : index
    %8 = vector.load %arg2[%c0_5, %7, %c0_6] : memref<1x32x32xf32, #tpu.memory_space<vmem>>, vector<1x8x32xf32>
    %9 = vector.shape_cast %8 : vector<1x8x32xf32> to vector<8x32xf32>
    %cst = arith.constant dense<0.000000e+00> : vector<8x32xf32>
    %10 = tpu.matmul %4, %3, %cst {dimension_numbers = #tpu.dot_dimension_numbers<[1], [0], [0], [1], [0, 0, 1, 1], [], []>} : vector<8x32xf32>, vector<32x32xf32>, vector<8x32xf32> -> vector<8x32xf32>
    %11 = arith.addf %9, %10 : vector<8x32xf32>
    %12 = math.tanh %11 : vector<8x32xf32>
    %c1_i32 = arith.constant 1 : i32
    %c8_i32_7 = arith.constant 8 : i32
    %13 = arith.muli %c1_i32, %c8_i32_7 : i32
    %14 = tpu.assume_multiple %13, 8 : i32
    %c0_8 = arith.constant 0 : index
    %15 = arith.index_cast %14 : i32 to index
    %c0_9 = arith.constant 0 : index
    %16 = vector.load %arg2[%c0_8, %15, %c0_9] : memref<1x32x32xf32, #tpu.memory_space<vmem>>, vector<1x8x32xf32>
    %17 = vector.shape_cast %16 : vector<1x8x32xf32> to vector<8x32xf32>
    %cst_10 = arith.constant dense<0.000000e+00> : vector<8x32xf32>
    %18 = tpu.matmul %12, %3, %cst_10 {dimension_numbers = #tpu.dot_dimension_numbers<[1], [0], [0], [1], [0, 0, 1, 1], [], []>} : vector<8x32xf32>, vector<32x32xf32>, vector<8x32xf32> -> vector<8x32xf32>
    %19 = arith.addf %17, %18 : vector<8x32xf32>
    %20 = math.tanh %19 : vector<8x32xf32>
    %c2_i32 = arith.constant 2 : i32
    %c8_i32_11 = arith.constant 8 : i32
    %21 = arith.muli %c2_i32, %c8_i32_11 : i32
    %22 = tpu.assume_multiple %21, 8 : i32
    %c0_12 = arith.constant 0 : index
    %23 = arith.index_cast %22 : i32 to index
    %c0_13 = arith.constant 0 : index
    %24 = vector.load %arg2[%c0_12, %23, %c0_13] : memref<1x32x32xf32, #tpu.memory_space<vmem>>, vector<1x8x32xf32>
    %25 = vector.shape_cast %24 : vector<1x8x32xf32> to vector<8x32xf32>
    %cst_14 = arith.constant dense<0.000000e+00> : vector<8x32xf32>
    %26 = tpu.matmul %20, %3, %cst_14 {dimension_numbers = #tpu.dot_dimension_numbers<[1], [0], [0], [1], [0, 0, 1, 1], [], []>} : vector<8x32xf32>, vector<32x32xf32>, vector<8x32xf32> -> vector<8x32xf32>
    %27 = arith.addf %25, %26 : vector<8x32xf32>
    %28 = math.tanh %27 : vector<8x32xf32>
    %c3_i32 = arith.constant 3 : i32
    %c8_i32_15 = arith.constant 8 : i32
    %29 = arith.muli %c3_i32, %c8_i32_15 : i32
    %30 = tpu.assume_multiple %29, 8 : i32
    %c0_16 = arith.constant 0 : index
    %31 = arith.index_cast %30 : i32 to index
    %c0_17 = arith.constant 0 : index
    %32 = vector.load %arg2[%c0_16, %31, %c0_17] : memref<1x32x32xf32, #tpu.memory_space<vmem>>, vector<1x8x32xf32>
    %33 = vector.shape_cast %32 : vector<1x8x32xf32> to vector<8x32xf32>
    %cst_18 = arith.constant dense<0.000000e+00> : vector<8x32xf32>
    %34 = tpu.matmul %28, %3, %cst_18 {dimension_numbers = #tpu.dot_dimension_numbers<[1], [0], [0], [1], [0, 0, 1, 1], [], []>} : vector<8x32xf32>, vector<32x32xf32>, vector<8x32xf32> -> vector<8x32xf32>
    %35 = arith.addf %33, %34 : vector<8x32xf32>
    %36 = math.tanh %35 : vector<8x32xf32>
    %c4_i32 = arith.constant 4 : i32
    %c0_19 = arith.constant 0 : index
    %c0_20 = arith.constant 0 : index
    %37 = vector.load %arg5[%c0_19, %c0_20] : memref<8x32xf32, #tpu.memory_space<vmem>>, vector<8x32xf32>
    tpu.vector_store %arg5[%c0_19, %c0_20], %36 {strides = array<i32>} : memref<8x32xf32, #tpu.memory_space<vmem>>, vector<8x32xf32>,
    %c2_i32_21 = arith.constant 2 : i32
    %38 = arith.cmpi eq, %arg1, %c2_i32_21 : i32
    %39 = arith.extui %38 : i1 to i32
    %c0_i32_22 = arith.constant 0 : i32
    %40 = arith.cmpi ne, %39, %c0_i32_22 : i32
    scf.if %40 {
      %c0_23 = arith.constant 0 : index
      %c0_24 = arith.constant 0 : index
      %c0_25 = arith.constant 0 : index
      %41 = vector.load %arg4[%c0_23, %c0_24, %c0_25] : memref<1x8x32xf32, #tpu.memory_space<vmem>>, vector<1x8x32xf32>
      %42 = vector.shape_cast %41 : vector<1x8x32xf32> to vector<8x32xf32>
      %43 = vector.shape_cast %36 : vector<8x32xf32> to vector<1x8x32xf32>
      tpu.vector_store %arg4[%c0_23, %c0_24, %c0_25], %43 {strides = array<i32>} : memref<1x8x32xf32, #tpu.memory_space<vmem>>, vector<1x8x32xf32>,
    } else {
    }
    return
  }
  func.func @transform_0(%arg0: i32, %arg1: i32) -> (i32, i32, i32) {
    %c0_i32 = arith.constant 0 : i32
    %c0_i32_0 = arith.constant 0 : i32
    return %arg0, %arg1, %c0_i32 : i32, i32, i32
  }
  func.func @transform_1(%arg0: i32, %arg1: i32) -> (i32, i32) {
    %c0_i32 = arith.constant 0 : i32
    %c0_i32_0 = arith.constant 0 : i32
    %c0_i32_1 = arith.constant 0 : i32
    return %c0_i32, %c0_i32_0 : i32, i32
  }
  func.func @transform_2(%arg0: i32, %arg1: i32) -> (i32, i32, i32) {
    %c0_i32 = arith.constant 0 : i32
    %c0_i32_0 = arith.constant 0 : i32
    %c0_i32_1 = arith.constant 0 : i32
    return %arg0, %c0_i32, %c0_i32_0 : i32, i32, i32
  }
}

</mosaic_0001>

<llo_original>
// kernel: tpu_custom_call.1
$region0: #{tpu_custom_call.1}
  #allocation0 [shape = 'u32[]', space=smem, size = 0x4, offset = 0x4, fixed_abs, tag = 'smem constant byte address 0x4 - core index']
  #allocation1 [shape = 'u32[72,128]{1,0:T(1,128)}', space=vmem, size = 0x9000, scoped, tag = 'internal scratch']
  #allocation2 [shape = 'f32[8,32]{1,0:T(8,128)}', space=vmem, size = 0x1000, scoped, tag = 'scratch operand']
  %s0 = inlined_call_operand.vmem [shape: f32[1,96,32], index: 0, kind: input, shape index: {}]
  %s1 = inlined_call_operand.vmem [shape: f32[32,32], index: 1, kind: input, shape index: {}]
  %s2 = inlined_call_operand.hbm [shape: f32[1,8,32], index: 2, kind: output, shape index: {}]
  %s3 = sld [smem:[#allocation0]]
  $region49: #{tpu_custom_call.1} parent=0
    _
  %s5 = ssub.s32 1, %s3
  %s6 = scalar_select 0, %s5, %s3
  $region1: #{tpu_custom_call.1} parent=0
    #allocation3 [shape = 'u8[4096]{0}', space=vmem, size = 0x1000, scoped, tag = 'output window, operand 0, single buffered']
    #allocation4 [shape = 's32[2]{0}', space=sflag, size = 0x8, scoped, tag = 'scoped memory for tpu_custom_call.1']
    %7 = vsyncpa [#allocation4], 0
    loop: start=0, step=1, limit=5
    $region2: #{tpu_custom_call.1} parent=1 // loop_pre_header
      _
    $region3: #{tpu_custom_call.1} parent=1 // loop_header
      %s9 = sphi 0, %s13
      %p10 = scmp.ge.s32.totalorder %s9, 5
      %s16 = sphi 0, %s28
      %s17 = sphi 0, %s24
      %s18 = sphi 0, %s16
      %s19 = sphi 0, %s17
      %s20 = sphi 0, %s18
      %s21 = sphi 0, %s19
      %s33 = sphi 0, %s35
      %s36 = sphi 0, %s33
      %s37 = sphi 0, %s36
      %s53 = sphi 0, %s37
      %s57 = sphi 0, %s57
      %s59 = sphi 0, %s57
      %s60 = sphi 0, %s59
      %s74 = sphi 0, %s60
      %s80 = sphi 0, %s82
      %s83 = sphi 0, %s80
      %s84 = sphi 0, %s83
      %s100 = sphi 0, %s84
    $region4: #{tpu_custom_call.1} parent=1 // loop_header_branch
      %12 = sbr.rel (%p10) target = $region8
    $region5: #{tpu_custom_call.1} parent=1 // loop_body
      %s14 = ssub.s32 %s9, 1
      %s15 = ssub.s32 %s9, 2
      %s22 = sadd.s32 1, %s17
      %p23 = scmp.ge.s32.totalorder %s22, 3
      %s24 = scalar_select %p23, 0, %s22
      %s25 = sadd.s32 1, %s16
      %s26 = scalar_select %p23, %s25, %s16
      %p27 = scmp.ge.s32.totalorder %s26, 1
      %s28 = scalar_select %p27, 0, %s26
      %s29 = ssub.s32 %s16, %s28
      %s30 = ssub.s32 %s17, %s24
      %s31 = sor.u32 %s29, %s30
      %p32 = scmp.eq.s32.totalorder %s31, 0
      %s34 = sadd.s32 %s33, 1
      %s35 = scalar_select %p32, %s33, %s34
      %p38 = pneg %p32
      %p39 = scmp.eq.s32.totalorder %s9, 2
      %p40 = por %p38, %p39
      %p41 = scmp.ne.s32.totalorder %s33, %s36
      %p42 = scmp.eq.s32.totalorder %s9, 0
      %p43 = por %p41, %p42
      %p44 = scmp.ne.s32.totalorder %s33, %s36
      %p45 = scmp.eq.s32.totalorder %s14, 2
      %p46 = por %p44, %p45
      %p47 = scmp.ne.s32.totalorder %s36, %s37
      %p48 = scmp.eq.s32.totalorder %s14, 0
      %p49 = por %p47, %p48
      %p50 = scmp.ne.s32.totalorder %s36, %s37
      %p51 = scmp.eq.s32.totalorder %s15, 2
      %p52 = por %p50, %p51
      %p54 = scmp.ne.s32.totalorder %s37, %s53
      %p55 = scmp.eq.s32.totalorder %s15, 0
      %p56 = por %p54, %p55
      %s58 = sadd.s32 %s57, 1
      %p61 = scmp.eq.s32.totalorder %s9, 2
      %p62 = scmp.ne.s32.totalorder %s57, %s59
      %p63 = scmp.eq.s32.totalorder %s9, 0
      %p64 = por %p62, %p63
      %p65 = scmp.ne.s32.totalorder %s57, %s59
      %p66 = scmp.eq.s32.totalorder %s14, 2
      %p67 = por %p65, %p66
      %p68 = scmp.ne.s32.totalorder %s59, %s60
      %p69 = scmp.eq.s32.totalorder %s14, 0
      %p70 = por %p68, %p69
      %p71 = scmp.ne.s32.totalorder %s59, %s60
      %p72 = scmp.eq.s32.totalorder %s15, 2
      %p73 = por %p71, %p72
      %p75 = scmp.ne.s32.totalorder %s60, %s74
      %p76 = scmp.eq.s32.totalorder %s15, 0
      %p77 = por %p75, %p76
      %s78 = ssub.s32 %s16, %s28
      %p79 = scmp.eq.s32.totalorder %s78, 0
      %s81 = sadd.s32 %s80, 1
      %s82 = scalar_select %p79, %s80, %s81
      %p85 = pneg %p79
      %p86 = scmp.eq.s32.totalorder %s9, 2
      %p87 = por %p85, %p86
      %p88 = scmp.ne.s32.totalorder %s80, %s83
      %p89 = scmp.eq.s32.totalorder %s9, 0
      %p90 = por %p88, %p89
      %p91 = scmp.ne.s32.totalorder %s80, %s83
      %p92 = scmp.eq.s32.totalorder %s14, 2
      %p93 = por %p91, %p92
      %p94 = scmp.ne.s32.totalorder %s83, %s84
      %p95 = scmp.eq.s32.totalorder %s14, 0
      %p96 = por %p94, %p95
      %p97 = scmp.ne.s32.totalorder %s83, %s84
      %p98 = scmp.eq.s32.totalorder %s15, 2
      %p99 = por %p97, %p98
      %p101 = scmp.ne.s32.totalorder %s84, %s100
      %p102 = scmp.eq.s32.totalorder %s15, 0
      %p103 = por %p101, %p102
      %p104 = scmp.le.s32.totalorder 1, %s9
      %p105 = scmp.lt.s32.totalorder %s9, 4
      %p106 = pnand %p104, %p105
      %p107 = pneg %p106
      // Predicated region
      $region9: #{tpu_custom_call.1} parent=5 // pred_check
        _
      $region10: #{tpu_custom_call.1} parent=5 // pred_check_branch
        %109 = sbr.rel (%p106) target = $region12
      $region11: #{tpu_custom_call.1} parent=5 // pred_region
        %s110 = ssub.s32 %s9, 1
        // Predicated region
        $region13: #{tpu_custom_call.1} parent=11 // pred_check
          %p111 = pneg %p70
        $region14: #{tpu_custom_call.1} parent=11 // pred_check_branch
          %113 = sbr.rel (%p111) target = $region16
        $region15: #{tpu_custom_call.1} parent=11 // pred_region
          _
        $region16: #{tpu_custom_call.1} parent=11 // pred_fallthru
          _
      $region12: #{tpu_custom_call.1} parent=5 // pred_fallthru
        _
      %p114 = scmp.lt.s32.totalorder %s9, 3
      // Predicated region
      $region17: #{tpu_custom_call.1} parent=5 // pred_check
        %p115 = pneg %p114
      $region18: #{tpu_custom_call.1} parent=5 // pred_check_branch
        %117 = sbr.rel (%p115) target = $region20
      $region19: #{tpu_custom_call.1} parent=5 // pred_region
        // Predicated region
        $region21: #{tpu_custom_call.1} parent=19 // pred_check
          %p118 = pneg %p43
        $region22: #{tpu_custom_call.1} parent=19 // pred_check_branch
          %120 = sbr.rel (%p118) target = $region24
        $region23: #{tpu_custom_call.1} parent=19 // pred_region
          %s121 = smul.u32 4, %s17
          %p122 = scmp.lt.s32.totalorder %s16, 0
          %s123 = scalar_select %p122, %s16, 0
          %p124 = scmp.lt.s32.totalorder %s121, 11
          %s125 = scalar_select %p124, %s121, 11
          %s126 = smul.addr %s123, 12
          %s127 = sadd.s32 %s125, %s126
          %s128 = smul.addr %s127, 8
          %s129 = scalar_lea.vmem %s0, %s128
          %s130 = smul.u32 4, %s17
        $region24: #{tpu_custom_call.1} parent=19 // pred_fallthru
          _
      $region20: #{tpu_custom_call.1} parent=5 // pred_fallthru
        _
      %p131 = scmp.le.s32.totalorder 1, %s9
      %p132 = scmp.lt.s32.totalorder %s9, 4
      %p133 = pnand %p131, %p132
      %p134 = pneg %p133
      // Predicated region
      $region25: #{tpu_custom_call.1} parent=5 // pred_check
        _
      $region26: #{tpu_custom_call.1} parent=5 // pred_check_branch
        %136 = sbr.rel (%p133) target = $region28
      $region27: #{tpu_custom_call.1} parent=5 // pred_region
        %s137 = ssub.s32 %s9, 1
        %s138 = smul.u32 4, %s19
        %p139 = scmp.lt.s32.totalorder %s18, 0
        %s140 = scalar_select %p139, %s18, 0
        %p141 = scmp.lt.s32.totalorder %s138, 11
        %s142 = scalar_select %p141, %s138, 11
        %s143 = smul.addr %s140, 12
        %s144 = sadd.s32 %s142, %s143
        %s145 = smul.addr %s144, 8
        %s146 = scalar_lea.vmem %s0, %s145
        %p147 = pneg %p49
        %p148 = pneg %p46
        %p149 = pneg %p70
        %p150 = pneg %p67
        %p151 = pneg %p96
        %p152 = pneg %p93
        %s153 = smul.u32 4, %s19
        %p154 = scmp.lt.s32.totalorder %s18, 0
        %s155 = scalar_select %p154, %s18, 0
        %p156 = scmp.lt.s32.totalorder %s153, 11
        %s157 = scalar_select %p156, %s153, 11
        %s158 = smul.addr %s155, 12
        %s159 = sadd.s32 %s157, %s158
        %s160 = smul.addr %s159, 8
        %s161 = scalar_lea.vmem %s0, %s160
        %s162 = smul.u32 4, %s19
        %p163 = scmp.eq.s32.totalorder %s19, 0
        // Predicated region
        $region29: #{tpu_custom_call.1} parent=27 // pred_check
          %p164 = pneg %p163
        $region30: #{tpu_custom_call.1} parent=27 // pred_check_branch
          %166 = sbr.rel (%p164) target = $region32
        $region31: #{tpu_custom_call.1} parent=27 // pred_region
          %vm167 = vcmask 261120
          %168 = vst.msk [vmem:[#allocation2] sm:$0xff] %vm167, 0.0
        $region32: #{tpu_custom_call.1} parent=27 // pred_fallthru
          _
        %v169 = vld [vmem:[%s1] sm:$0xff]
        %v170 = vld [vmem:[%s1 + $0x8] sm:$0xff]
        %v171 = vld [vmem:[%s1 + $0x10] sm:$0xff]
        %v172 = vld [vmem:[%s1 + $0x18] sm:$0xff]
        %v173 = vld [vmem:[#allocation2] sm:$0xff]
        %v174 = vld [vmem:[%s161] sm:$0xff]
        %vm175 = vcmask 261120
        %v177 = vsel %vm175, %v173, 0
        %179 = vmatpush.msra.mxu0 0.0
        %180 = vmatpush.msra.mxu0 0.0
        %181 = vmatpush.msra.mxu0 0.0
        %182 = vmatpush.msra.mxu0 0.0
        %183 = vmatpush.msra.mxu0 0.0
        %184 = vmatpush.msra.mxu0 0.0
        %185 = vmatpush.msra.mxu0 0.0
        %186 = vmatpush.msra.mxu0 0.0
        %187 = vmatpush.msra.mxu0 0.0
        %188 = vmatpush.msra.mxu0 0.0
        %189 = vmatpush.msra.mxu0 0.0
        %190 = vmatpush.msra.mxu0 0.0
        %191 = vmatpush.msra.mxu0 %v172
        %192 = vmatpush.msra.mxu0 %v171
        %193 = vmatpush.msra.mxu0 %v170
        %194 = vmatpush.msra.mxu0 %v169
        %195 = vmatmul.f32.gmra.mxu0 %v177
        %v196 = vpop.f32.mrf.mxu0
        %v197 = vadd.f32 0.0, %v196
        %198 = vdwg.mxu0
        %v199 = vadd.f32 %v174, %v197
        %v200 = vtanh.pop %v199
        %s201 = scalar_lea.vmem %s161, 8
        %v202 = vld [vmem:[%s201] sm:$0xff]
        %v204 = vsel %vm175, %v200, 0
        %206 = vmatpush.msra.mxu0 0.0
        %207 = vmatpush.msra.mxu0 0.0
        %208 = vmatpush.msra.mxu0 0.0
        %209 = vmatpush.msra.mxu0 0.0
        %210 = vmatpush.msra.mxu0 0.0
        %211 = vmatpush.msra.mxu0 0.0
        %212 = vmatpush.msra.mxu0 0.0
        %213 = vmatpush.msra.mxu0 0.0
        %214 = vmatpush.msra.mxu0 0.0
        %215 = vmatpush.msra.mxu0 0.0
        %216 = vmatpush.msra.mxu0 0.0
        %217 = vmatpush.msra.mxu0 0.0
        %218 = vmatpush.msra.mxu0 %v172
        %219 = vmatpush.msra.mxu0 %v171
        %220 = vmatpush.msra.mxu0 %v170
        %221 = vmatpush.msra.mxu0 %v169
        %222 = vmatmul.f32.gmra.mxu0 %v204
        %v223 = vpop.f32.mrf.mxu0
        %v224 = vadd.f32 0.0, %v223
        %225 = vdwg.mxu0
        %v226 = vadd.f32 %v202, %v224
        %v227 = vtanh.pop %v226
        %s228 = scalar_lea.vmem %s161, 16
        %v229 = vld [vmem:[%s228] sm:$0xff]
        %v231 = vsel %vm175, %v227, 0
        %233 = vmatpush.msra.mxu0 0.0
        %234 = vmatpush.msra.mxu0 0.0
        %235 = vmatpush.msra.mxu0 0.0
        %236 = vmatpush.msra.mxu0 0.0
        %237 = vmatpush.msra.mxu0 0.0
        %238 = vmatpush.msra.mxu0 0.0
        %239 = vmatpush.msra.mxu0 0.0
        %240 = vmatpush.msra.mxu0 0.0
        %241 = vmatpush.msra.mxu0 0.0
        %242 = vmatpush.msra.mxu0 0.0
        %243 = vmatpush.msra.mxu0 0.0
        %244 = vmatpush.msra.mxu0 0.0
        %245 = vmatpush.msra.mxu0 %v172
        %246 = vmatpush.msra.mxu0 %v171
        %247 = vmatpush.msra.mxu0 %v170
        %248 = vmatpush.msra.mxu0 %v169
        %249 = vmatmul.f32.gmra.mxu0 %v231
        %v250 = vpop.f32.mrf.mxu0
        %v251 = vadd.f32 0.0, %v250
        %252 = vdwg.mxu0
        %v253 = vadd.f32 %v229, %v251
        %v254 = vtanh.pop %v253
        %s255 = scalar_lea.vmem %s161, 24
        %v256 = vld [vmem:[%s255] sm:$0xff]
        %v258 = vsel %vm175, %v254, 0
        %260 = vmatpush.msra.mxu0 0.0
        %261 = vmatpush.msra.mxu0 0.0
        %262 = vmatpush.msra.mxu0 0.0
        %263 = vmatpush.msra.mxu0 0.0
        %264 = vmatpush.msra.mxu0 0.0
        %265 = vmatpush.msra.mxu0 0.0
        %266 = vmatpush.msra.mxu0 0.0
        %267 = vmatpush.msra.mxu0 0.0
        %268 = vmatpush.msra.mxu0 0.0
        %269 = vmatpush.msra.mxu0 0.0
        %270 = vmatpush.msra.mxu0 0.0
        %271 = vmatpush.msra.mxu0 0.0
        %272 = vmatpush.msra.mxu0 %v172
        %273 = vmatpush.msra.mxu0 %v171
        %274 = vmatpush.msra.mxu0 %v170
        %275 = vmatpush.msra.mxu0 %v169
        %276 = vmatmul.f32.gmra.mxu0 %v258
        %v277 = vpop.f32.mrf.mxu0
        %v278 = vadd.f32 0.0, %v277
        %279 = vdwg.mxu0
        %v280 = vadd.f32 %v256, %v278
        %v281 = vtanh.pop %v280
        %282 = vst.msk [vmem:[#allocation2] sm:$0xff] %vm175, %v281
        %p283 = scmp.eq.s32.totalorder %s19, 2
        // Predicated region
        $region33: #{tpu_custom_call.1} parent=27 // pred_check
          %p284 = pneg %p283
        $region34: #{tpu_custom_call.1} parent=27 // pred_check_branch
          %286 = sbr.rel (%p284) target = $region36
        $region35: #{tpu_custom_call.1} parent=27 // pred_region
          %287 = vst.msk [vmem:[#allocation3] sm:$0xff] %vm175, %v281
        $region36: #{tpu_custom_call.1} parent=27 // pred_fallthru
          _
        // Predicated region
        $region37: #{tpu_custom_call.1} parent=27 // pred_check
          %p288 = pneg %p93
        $region38: #{tpu_custom_call.1} parent=27 // pred_check_branch
          %290 = sbr.rel (%p288) target = $region40
        $region39: #{tpu_custom_call.1} parent=27 // pred_region
          %292 = vsyncadd [#allocation4], 0
          %s293 = smul.addr %s18, 8
          %s294 = scalar_lea.hbm %s2, %s293
          %s296 = sshll.u32 [#allocation3], 4
          %s297 = int_to_ptr.vmem [resolvable:$true] %s296
          %s298 = sshll.u32 %s294, 4
          %s299 = int_to_ptr.hbm [resolvable:$true] %s298
          %301 = dma.vmem_to_hbm [thread:$0]  %s297, 128, %s299, [#allocation4]
        $region40: #{tpu_custom_call.1} parent=27 // pred_fallthru
          _
        // Predicated region
        $region41: #{tpu_custom_call.1} parent=27 // pred_check
          %p302 = pneg %p93
        $region42: #{tpu_custom_call.1} parent=27 // pred_check_branch
          %304 = sbr.rel (%p302) target = $region44
        $region43: #{tpu_custom_call.1} parent=27 // pred_region
          %306 = dma.done [#allocation4], 128
        $region44: #{tpu_custom_call.1} parent=27 // pred_fallthru
          _
      $region28: #{tpu_custom_call.1} parent=5 // pred_fallthru
        _
      %p307 = scmp.le.s32.totalorder 2, %s9
      // Predicated region
      $region45: #{tpu_custom_call.1} parent=5 // pred_check
        %p308 = pneg %p307
      $region46: #{tpu_custom_call.1} parent=5 // pred_check_branch
        %310 = sbr.rel (%p308) target = $region48
      $region47: #{tpu_custom_call.1} parent=5 // pred_region
        %s311 = ssub.s32 %s9, 2
      $region48: #{tpu_custom_call.1} parent=5 // pred_fallthru
        _
    $region6: #{tpu_custom_call.1} parent=1 // loop_footer
      %s13 = sadd.s32 1, %s9
    $region7: #{tpu_custom_call.1} parent=1 // loop_footer_branch
      %8 = sbr.rel target = $region3
    $region8: #{tpu_custom_call.1} parent=1 // loop_exit
      _
    %312 = vsyncpa [#allocation4], 1
    %s313 = scalar_lea.sflag [#allocation4], 1
    %314 = vsyncpa %s313, 1

</llo_original>
